<compile_context>
chip_gen: v7x
topology: tpu7x:2x2x1
jax: 0.10.0
libtpu: 0.0.40
codegen_flags: <defaults>
</compile_context>

<pallas_src>
import functools

import jax
import jax.numpy as jnp
import numpy as np
from jax.experimental import pallas as pl
from jax.experimental.pallas import tpu as pltpu

_EPS = 1e-5


def _normalizer_kernel(x_ref, s2_ref, b2_ref, o_ref, *, channel_norm, approx):
    # x_ref: (Nb, C, T_tile); s2_ref / b2_ref: (1, C, T_tile) lane-replicated
    # fused scale / bias (running-stat norm + affine folded in the wrapper).
    x = x_ref[...].astype(jnp.float32)
    if channel_norm:
        c = x.shape[1]
        mean = jnp.mean(x, axis=1, keepdims=True)                    # (Nb, 1, Tt)
        x = x - mean
        # torch.std default is unbiased (divide by C-1); eps is added to std.
        var = jnp.sum(x * x, axis=1, keepdims=True) * (1.0 / (c - 1))
        inv_std = pl.reciprocal(jnp.sqrt(var) + _EPS, approx=approx)  # EUP slot
        x = x * inv_std
    o_ref[...] = (x * s2_ref[...] + b2_ref[...]).astype(o_ref.dtype)


def _choose_tiles(n, c, t, itemsize, max_block_bytes):
    """Pick (Nb, T_tile) for (Nb, C, T_tile) blocks.

    Lane tile: largest 128-multiple candidate (<= T, within the dtype-aware
    byte budget); exact divisors of T are preferred, otherwise the time grid
    uses pl.cdiv and the tail block relies on masked OOB stores.  Batch tile:
    largest divisor of N fitting the budget; only shrunk for megacore when the
    total grid would otherwise be a single step.
    """
    # Sublane packing of the second-minor dim: 8 rows (f32), 16 (bf16), 32 (i8).
    sub_mult = 8 * max(1, 4 // itemsize)
    c_pad = -(-c // sub_mult) * sub_mult
    row_bytes = c_pad * itemsize

    if t < 128:
        t_tile = t
    else:
        cands = {8192, 4096, 2048, 1024, 512, 256, 128}
        if t % 128 == 0:
            cands.add(t)
        cands = sorted(cands, reverse=True)
        fitting_lane = [v for v in cands
                        if v <= t and row_bytes * v <= max_block_bytes] or [128]
        exact = [v for v in fitting_lane if t % v == 0]
        t_tile = exact[0] if exact else fitting_lane[0]

    t_steps = -(-t // t_tile)
    divisors = [d for d in range(1, n + 1) if n % d == 0]
    fitting = [d for d in divisors
               if d * c_pad * t_tile * itemsize <= max_block_bytes] or [1]
    nb = max(fitting)
    if (n // nb) * t_steps < 2:            # single grid step -> try to give
        multi = [d for d in fitting if n // d >= 2]   # both TCs work (v7x)
        if multi:
            nb = max(multi)
    return nb, t_tile


def normalizer_forward(x, moving_average, moving_variance, scale=None, bias=None,
                       *, channel_norm=True, approx_reciprocal=False,
                       max_block_bytes=6 << 20, vmem_limit_bytes=48 << 20):
    """Eval-mode Normalizer forward.

    x: (N, C, T); moving_average / moving_variance / scale / bias: (1, C, 1).
    Output has the same dtype as x (math is done in float32 in-kernel).
    """
    n, c, t = x.shape
    if channel_norm and c < 2:
        raise ValueError("channelNorm needs C >= 2 (unbiased std divides by C-1).")

    f32 = jnp.float32
    ma = moving_average.reshape(1, c, 1).astype(f32)
    mv = moving_variance.reshape(1, c, 1).astype(f32)
    sc = jnp.ones((1, c, 1), f32) if scale is None else scale.reshape(1, c, 1).astype(f32)
    bs = jnp.zeros((1, c, 1), f32) if bias is None else bias.reshape(1, c, 1).astype(f32)

    # Fold running-stat normalization + affine into one per-channel scale/bias,
    # computed once here instead of sqrt/abs/divide on every grid step.
    s2 = jnp.abs(sc) / (jnp.sqrt(mv) + _EPS)
    b2 = bs - ma * s2

    itemsize = jnp.dtype(x.dtype).itemsize
    nb, t_tile = _choose_tiles(n, c, t, itemsize, max_block_bytes)

    # Lane-replicate fused params so the in-kernel FMA needs no lane broadcast.
    s2 = jnp.broadcast_to(s2, (1, c, t_tile))
    b2 = jnp.broadcast_to(b2, (1, c, t_tile))

    grid = (n // nb, pl.cdiv(t, t_tile))

    x_spec = pl.BlockSpec((nb, c, t_tile), lambda i, j: (i, 0, j))
    p_spec = pl.BlockSpec((1, c, t_tile), lambda i, j: (0, 0, 0))

    kernel = functools.partial(_normalizer_kernel,
                               channel_norm=channel_norm,
                               approx=approx_reciprocal)

    return pl.pallas_call(
        kernel,
        out_shape=jax.ShapeDtypeStruct((n, c, t), x.dtype),
        grid=grid,
        in_specs=[x_spec, p_spec, p_spec],
        out_specs=x_spec,
        compiler_params=pltpu.CompilerParams(
            dimension_semantics=("parallel", "parallel"),
            vmem_limit_bytes=vmem_limit_bytes),
    )(x, s2, b2)


def _reference_forward(x, moving_average, moving_variance, scale, bias):
    """Pure-JAX (f32) reference mirroring the PyTorch eval-mode forward."""
    x = x.astype(jnp.float32)
    c = x.shape[1]
    mean_c = jnp.mean(x, axis=1, keepdims=True)
    std_c = jnp.sqrt(jnp.sum((x - mean_c) ** 2, axis=1, keepdims=True) / (c - 1))
    x = (x - mean_c) / (std_c + _EPS)
    x = (x - moving_average) / (jnp.sqrt(moving_variance) + _EPS)
    return x * jnp.abs(scale) + bias


def _make_inputs(key, n, c, t, dtype):
    kx, kma, kmv, ksc, kbs = jax.random.split(key, 5)
    x = jax.random.normal(kx, (n, c, t), dtype=jnp.float32).astype(dtype)
    ma = 0.1 * jax.random.normal(kma, (1, c, 1), dtype=jnp.float32)
    mv = 1.0 + 0.1 * jax.random.uniform(kmv, (1, c, 1), dtype=jnp.float32)
    sc = 1.0 + 0.1 * jax.random.normal(ksc, (1, c, 1), dtype=jnp.float32)
    bs = 0.1 * jax.random.normal(kbs, (1, c, 1), dtype=jnp.float32)
    return x, ma, mv, sc, bs


if __name__ == "__main__":
    k1, k2, k3 = jax.random.split(jax.random.PRNGKey(0), 3)

    # --- Config A: float32, (N=4, C=4, T=256); exact reciprocal (default).
    xa, ma_a, mv_a, sc_a, bs_a = _make_inputs(k1, 4, 4, 256, jnp.float32)
    ref_a = _reference_forward(xa, ma_a, mv_a, sc_a, bs_a)
    out_a = jax.block_until_ready(
        normalizer_forward(xa, ma_a, mv_a, sc_a, bs_a))
    np.testing.assert_allclose(np.asarray(out_a), np.asarray(ref_a),
                               rtol=1e-5, atol=1e-5)

    # Optional fast path: EUP approximate reciprocal -> looser tolerance.
    out_fast = jax.block_until_ready(
        normalizer_forward(xa, ma_a, mv_a, sc_a, bs_a, approx_reciprocal=True))
    np.testing.assert_allclose(np.asarray(out_fast), np.asarray(ref_a),
                               rtol=1e-2, atol=1e-2)

    # --- Config B: bf16 activations in/out (f32 math in-kernel), C = 8.
    xb, ma_b, mv_b, sc_b, bs_b = _make_inputs(k2, 2, 8, 384, jnp.bfloat16)
    ref_b = _reference_forward(xb, ma_b, mv_b, sc_b, bs_b)
    out_b = jax.block_until_ready(
        normalizer_forward(xb, ma_b, mv_b, sc_b, bs_b))
    np.testing.assert_allclose(np.asarray(out_b).astype(np.float32),
                               np.asarray(ref_b), rtol=3e-2, atol=3e-2)

    # --- Config C: float32, T=200 (not a multiple of 128) -> pl.cdiv time grid
    # with a masked tail block.
    xc, ma_c, mv_c, sc_c, bs_c = _make_inputs(k3, 2, 4, 200, jnp.float32)
    ref_c = _reference_forward(xc, ma_c, mv_c, sc_c, bs_c)
    out_c = jax.block_until_ready(
        normalizer_forward(xc, ma_c, mv_c, sc_c, bs_c))
    np.testing.assert_allclose(np.asarray(out_c), np.asarray(ref_c),
                               rtol=1e-5, atol=1e-5)

    print("KERNEL_OK")
</pallas_src>

<mosaic_0001>
module attributes {stable_mosaic.version = 11 : i64} {
  func.func @_normalizer_kernel(%arg0: i32, %arg1: i32, %arg2: memref<2x4x256xf32, #tpu.memory_space<vmem>>, %arg3: memref<1x4x256xf32, #tpu.memory_space<vmem>>, %arg4: memref<1x4x256xf32, #tpu.memory_space<vmem>>, %arg5: memref<2x4x256xf32, #tpu.memory_space<vmem>>) attributes {dimension_semantics = [#tpu.dimension_semantics<parallel>, #tpu.dimension_semantics<parallel>], iteration_bounds = array<i64: 2, 1>, scalar_prefetch = 0 : i64, scratch_operands = 0 : i64, tpu.core_type = #tpu.core_type<tc>, window_params = [{transform_indices = @transform_0, window_bounds = array<i64: 2, 4, 256>}, {pipeline_mode = #tpu.pipeline_mode<synchronous>, transform_indices = @transform_1, window_bounds = array<i64: 1, 4, 256>}, {pipeline_mode = #tpu.pipeline_mode<synchronous>, transform_indices = @transform_2, window_bounds = array<i64: 1, 4, 256>}, {transform_indices = @transform_3, window_bounds = array<i64: 2, 4, 256>}]} {
    %c0 = arith.constant 0 : index
    %c0_0 = arith.constant 0 : index
    %c0_1 = arith.constant 0 : index
    %0 = vector.load %arg2[%c0, %c0_0, %c0_1] : memref<2x4x256xf32, #tpu.memory_space<vmem>>, vector<2x4x256xf32>
    %cst = arith.constant dense<0.000000e+00> : vector<2x256xf32>
    %1 = vector.multi_reduction <add>, %0, %cst [1] : vector<2x4x256xf32> to vector<2x256xf32>
    %2 = vector.shape_cast %1 : vector<2x256xf32> to vector<2x1x256xf32>
    %cst_2 = arith.constant 4.000000e+00 : f32
    %3 = vector.broadcast %cst_2 : f32 to vector<2x1x256xf32>
    %4 = arith.divf %2, %3 : vector<2x1x256xf32>
    %5 = vector.broadcast %4 : vector<2x1x256xf32> to vector<2x4x256xf32>
    %6 = arith.subf %0, %5 : vector<2x4x256xf32>
    %7 = arith.mulf %6, %6 : vector<2x4x256xf32>
    %cst_3 = arith.constant dense<0.000000e+00> : vector<2x256xf32>
    %8 = vector.multi_reduction <add>, %7, %cst_3 [1] : vector<2x4x256xf32> to vector<2x256xf32>
    %9 = vector.shape_cast %8 : vector<2x256xf32> to vector<2x1x256xf32>
    %cst_4 = arith.constant 0.333333343 : f32
    %10 = vector.broadcast %cst_4 : f32 to vector<2x1x256xf32>
    %11 = arith.mulf %9, %10 : vector<2x1x256xf32>
    %12 = math.sqrt %11 : vector<2x1x256xf32>
    %cst_5 = arith.constant 9.99999974E-6 : f32
    %13 = vector.broadcast %cst_5 : f32 to vector<2x1x256xf32>
    %14 = arith.addf %12, %13 : vector<2x1x256xf32>
    %15 = tpu.reciprocal %14 : vector<2x1x256xf32> -> vector<2x1x256xf32>
    %16 = vector.broadcast %15 : vector<2x1x256xf32> to vector<2x4x256xf32>
    %17 = arith.mulf %6, %16 : vector<2x4x256xf32>
    %c0_6 = arith.constant 0 : index
    %c0_7 = arith.constant 0 : index
    %c0_8 = arith.constant 0 : index
    %18 = vector.load %arg3[%c0_6, %c0_7, %c0_8] : memref<1x4x256xf32, #tpu.memory_space<vmem>>, vector<1x4x256xf32>
    %19 = vector.broadcast %18 : vector<1x4x256xf32> to vector<2x4x256xf32>
    %20 = arith.mulf %17, %19 : vector<2x4x256xf32>
    %c0_9 = arith.constant 0 : index
    %c0_10 = arith.constant 0 : index
    %c0_11 = arith.constant 0 : index
    %21 = vector.load %arg4[%c0_9, %c0_10, %c0_11] : memref<1x4x256xf32, #tpu.memory_space<vmem>>, vector<1x4x256xf32>
    %22 = vector.broadcast %21 : vector<1x4x256xf32> to vector<2x4x256xf32>
    %23 = arith.addf %20, %22 : vector<2x4x256xf32>
    %c0_12 = arith.constant 0 : index
    %c0_13 = arith.constant 0 : index
    %c0_14 = arith.constant 0 : index
    %24 = vector.load %arg5[%c0_12, %c0_13, %c0_14] : memref<2x4x256xf32, #tpu.memory_space<vmem>>, vector<2x4x256xf32>
    tpu.vector_store %arg5[%c0_12, %c0_13, %c0_14], %23 {strides = array<i32>} : memref<2x4x256xf32, #tpu.memory_space<vmem>>, vector<2x4x256xf32>,
    return
  }
  func.func @transform_0(%arg0: i32, %arg1: i32) -> (i32, i32, i32) {
    %c0_i32 = arith.constant 0 : i32
    %c0_i32_0 = arith.constant 0 : i32
    return %arg0, %c0_i32, %arg1 : i32, i32, i32
  }
  func.func @transform_1(%arg0: i32, %arg1: i32) -> (i32, i32, i32) {
    %c0_i32 = arith.constant 0 : i32
    %c0_i32_0 = arith.constant 0 : i32
    %c0_i32_1 = arith.constant 0 : i32
    %c0_i32_2 = arith.constant 0 : i32
    return %c0_i32, %c0_i32_0, %c0_i32_1 : i32, i32, i32
  }
  func.func @transform_2(%arg0: i32, %arg1: i32) -> (i32, i32, i32) {
    %c0_i32 = arith.constant 0 : i32
    %c0_i32_0 = arith.constant 0 : i32
    %c0_i32_1 = arith.constant 0 : i32
    %c0_i32_2 = arith.constant 0 : i32
    return %c0_i32, %c0_i32_0, %c0_i32_1 : i32, i32, i32
  }
  func.func @transform_3(%arg0: i32, %arg1: i32) -> (i32, i32, i32) {
    %c0_i32 = arith.constant 0 : i32
    %c0_i32_0 = arith.constant 0 : i32
    return %arg0, %c0_i32, %arg1 : i32, i32, i32
  }
}

</mosaic_0001>

<llo_original>
// kernel: tpu_custom_call.1
$region0: #{tpu_custom_call.1}
  #allocation0 [shape = 'u32[]', space=smem, size = 0x4, offset = 0x4, fixed_abs, tag = 'smem constant byte address 0x4 - core index']
  #allocation1 [shape = 'u32[144,128]{1,0:T(1,128)}', space=vmem, size = 0x12000, scoped, tag = 'internal scratch']
  %s0 = inlined_call_operand.hbm [shape: f32[4,4,256], index: 0, kind: input, shape index: {}]
  %s1 = inlined_call_operand.hbm [shape: f32[1,4,256], index: 1, kind: input, shape index: {}]
  %s2 = inlined_call_operand.hbm [shape: f32[1,4,256], index: 2, kind: input, shape index: {}]
  %s3 = inlined_call_operand.hbm [shape: f32[4,4,256], index: 3, kind: output, shape index: {}]
  %s4 = sld [smem:[#allocation0]]
  $region57: #{tpu_custom_call.1} parent=0
    _
  %s6 = ssub.s32 1, %s4
  %s7 = scalar_select 0, %s6, %s4
  $region1: #{tpu_custom_call.1} parent=0
    #allocation2 [shape = 'u8[16384]{0}', space=vmem, size = 0x4000, scoped, tag = 'input window, operand 0']
    #allocation3 [shape = 's32[2]{0}', space=sflag, size = 0x8, scoped, tag = 'scoped memory for tpu_custom_call.1']
    #allocation4 [shape = 's32[2]{0}', space=sflag, size = 0x8, scoped, tag = 'scoped memory for tpu_custom_call.1']
    #allocation5 [shape = 'u8[4096]{0}', space=vmem, size = 0x1000, scoped, tag = 'input window, operand 1, single buffered']
    #allocation6 [shape = 's32[1]{0}', space=sflag, size = 0x4, scoped, tag = 'scoped memory for tpu_custom_call.1']
    #allocation7 [shape = 'u8[4096]{0}', space=vmem, size = 0x1000, scoped, tag = 'input window, operand 2, single buffered']
    #allocation8 [shape = 'u8[16384]{0}', space=vmem, size = 0x4000, scoped, tag = 'output window, operand 0']
    %8 = vsyncpa [#allocation3], 0
    %s9 = scalar_lea.sflag [#allocation3], 1
    %10 = vsyncpa %s9, 0
    %11 = vsyncpa [#allocation6], 0
    %12 = vsyncpa [#allocation4], 0
    %s13 = scalar_lea.sflag [#allocation4], 1
    %14 = vsyncpa %s13, 0
    loop: start=0, step=1, limit=4
    $region2: #{tpu_custom_call.1} parent=1 // loop_pre_header
      _
    $region3: #{tpu_custom_call.1} parent=1 // loop_header
      %s16 = sphi 0, %s20
      %p17 = scmp.ge.s32.totalorder %s16, 4
      %s23 = sphi 0, %s35
      %s24 = sphi 0, %s31
      %s25 = sphi 0, %s23
      %s26 = sphi 0, %s24
      %s27 = sphi 0, %s25
      %s28 = sphi 0, %s26
      %s40 = sphi 0, %s42
      %s43 = sphi 0, %s40
      %s44 = sphi 0, %s43
      %s60 = sphi 0, %s44
      %s64 = sphi 0, %s64
      %s66 = sphi 0, %s64
      %s67 = sphi 0, %s66
      %s81 = sphi 0, %s67
      %s85 = sphi 0, %s85
      %s87 = sphi 0, %s85
      %s88 = sphi 0, %s87
      %s102 = sphi 0, %s88
      %s110 = sphi 0, %s112
      %s113 = sphi 0, %s110
      %s114 = sphi 0, %s113
      %s130 = sphi 0, %s114
    $region4: #{tpu_custom_call.1} parent=1 // loop_header_branch
      %19 = sbr.rel (%p17) target = $region8
    $region5: #{tpu_custom_call.1} parent=1 // loop_body
      %s21 = ssub.s32 %s16, 1
      %s22 = ssub.s32 %s16, 2
      %s29 = sadd.s32 1, %s24
      %p30 = scmp.ge.s32.totalorder %s29, 1
      %s31 = scalar_select %p30, 0, %s29
      %s32 = sadd.s32 1, %s23
      %s33 = scalar_select %p30, %s32, %s23
      %p34 = scmp.ge.s32.totalorder %s33, 2
      %s35 = scalar_select %p34, 0, %s33
      %s36 = ssub.s32 %s23, %s35
      %s37 = ssub.s32 %s24, %s31
      %s38 = sor.u32 %s36, %s37
      %p39 = scmp.eq.s32.totalorder %s38, 0
      %s41 = sadd.s32 %s40, 1
      %s42 = scalar_select %p39, %s40, %s41
      %p45 = pneg %p39
      %p46 = scmp.eq.s32.totalorder %s16, 1
      %p47 = por %p45, %p46
      %p48 = scmp.ne.s32.totalorder %s40, %s43
      %p49 = scmp.eq.s32.totalorder %s16, 0
      %p50 = por %p48, %p49
      %p51 = scmp.ne.s32.totalorder %s40, %s43
      %p52 = scmp.eq.s32.totalorder %s21, 1
      %p53 = por %p51, %p52
      %p54 = scmp.ne.s32.totalorder %s43, %s44
      %p55 = scmp.eq.s32.totalorder %s21, 0
      %p56 = por %p54, %p55
      %p57 = scmp.ne.s32.totalorder %s43, %s44
      %p58 = scmp.eq.s32.totalorder %s22, 1
      %p59 = por %p57, %p58
      %p61 = scmp.ne.s32.totalorder %s44, %s60
      %p62 = scmp.eq.s32.totalorder %s22, 0
      %p63 = por %p61, %p62
      %s65 = sadd.s32 %s64, 1
      %p68 = scmp.eq.s32.totalorder %s16, 1
      %p69 = scmp.ne.s32.totalorder %s64, %s66
      %p70 = scmp.eq.s32.totalorder %s16, 0
      %p71 = por %p69, %p70
      %p72 = scmp.ne.s32.totalorder %s64, %s66
      %p73 = scmp.eq.s32.totalorder %s21, 1
      %p74 = por %p72, %p73
      %p75 = scmp.ne.s32.totalorder %s66, %s67
      %p76 = scmp.eq.s32.totalorder %s21, 0
      %p77 = por %p75, %p76
      %p78 = scmp.ne.s32.totalorder %s66, %s67
      %p79 = scmp.eq.s32.totalorder %s22, 1
      %p80 = por %p78, %p79
      %p82 = scmp.ne.s32.totalorder %s67, %s81
      %p83 = scmp.eq.s32.totalorder %s22, 0
      %p84 = por %p82, %p83
      %s86 = sadd.s32 %s85, 1
      %p89 = scmp.eq.s32.totalorder %s16, 1
      %p90 = scmp.ne.s32.totalorder %s85, %s87
      %p91 = scmp.eq.s32.totalorder %s16, 0
      %p92 = por %p90, %p91
      %p93 = scmp.ne.s32.totalorder %s85, %s87
      %p94 = scmp.eq.s32.totalorder %s21, 1
      %p95 = por %p93, %p94
      %p96 = scmp.ne.s32.totalorder %s87, %s88
      %p97 = scmp.eq.s32.totalorder %s21, 0
      %p98 = por %p96, %p97
      %p99 = scmp.ne.s32.totalorder %s87, %s88
      %p100 = scmp.eq.s32.totalorder %s22, 1
      %p101 = por %p99, %p100
      %p103 = scmp.ne.s32.totalorder %s88, %s102
      %p104 = scmp.eq.s32.totalorder %s22, 0
      %p105 = por %p103, %p104
      %s106 = ssub.s32 %s23, %s35
      %s107 = ssub.s32 %s24, %s31
      %s108 = sor.u32 %s106, %s107
      %p109 = scmp.eq.s32.totalorder %s108, 0
      %s111 = sadd.s32 %s110, 1
      %s112 = scalar_select %p109, %s110, %s111
      %p115 = pneg %p109
      %p116 = scmp.eq.s32.totalorder %s16, 1
      %p117 = por %p115, %p116
      %p118 = scmp.ne.s32.totalorder %s110, %s113
      %p119 = scmp.eq.s32.totalorder %s16, 0
      %p120 = por %p118, %p119
      %p121 = scmp.ne.s32.totalorder %s110, %s113
      %p122 = scmp.eq.s32.totalorder %s21, 1
      %p123 = por %p121, %p122
      %p124 = scmp.ne.s32.totalorder %s113, %s114
      %p125 = scmp.eq.s32.totalorder %s21, 0
      %p126 = por %p124, %p125
      %p127 = scmp.ne.s32.totalorder %s113, %s114
      %p128 = scmp.eq.s32.totalorder %s22, 1
      %p129 = por %p127, %p128
      %p131 = scmp.ne.s32.totalorder %s114, %s130
      %p132 = scmp.eq.s32.totalorder %s22, 0
      %p133 = por %p131, %p132
      %p134 = scmp.le.s32.totalorder 1, %s16
      %p135 = scmp.lt.s32.totalorder %s16, 3
      %p136 = pnand %p134, %p135
      %p137 = pneg %p136
      // Predicated region
      $region9: #{tpu_custom_call.1} parent=5 // pred_check
        _
      $region10: #{tpu_custom_call.1} parent=5 // pred_check_branch
        %139 = sbr.rel (%p136) target = $region12
      $region11: #{tpu_custom_call.1} parent=5 // pred_region
        %s140 = ssub.s32 %s16, 1
        // Predicated region
        $region13: #{tpu_custom_call.1} parent=11 // pred_check
          %p141 = pneg %p77
        $region14: #{tpu_custom_call.1} parent=11 // pred_check_branch
          %143 = sbr.rel (%p141) target = $region16
        $region15: #{tpu_custom_call.1} parent=11 // pred_region
          %s145 = ssub.s32 128, 128
          %146 = vsyncadd [#allocation6], %s145
          %s148 = sshll.u32 [#allocation5], 4
          %s149 = int_to_ptr.vmem [resolvable:$true] %s148
          %151 = dma.hbm_to_vmem [thread:$0]  %s1, 128, %s149, [#allocation6]
        $region16: #{tpu_custom_call.1} parent=11 // pred_fallthru
          _
        // Predicated region
        $region17: #{tpu_custom_call.1} parent=11 // pred_check
          %p152 = pneg %p98
        $region18: #{tpu_custom_call.1} parent=11 // pred_check_branch
          %154 = sbr.rel (%p152) target = $region20
        $region19: #{tpu_custom_call.1} parent=11 // pred_region
          %s156 = ssub.s32 128, 128
          %157 = vsyncadd [#allocation6], %s156
          %s159 = sshll.u32 [#allocation7], 4
          %s160 = int_to_ptr.vmem [resolvable:$true] %s159
          %162 = dma.hbm_to_vmem [thread:$0]  %s2, 128, %s160, [#allocation6]
        $region20: #{tpu_custom_call.1} parent=11 // pred_fallthru
          _
      $region12: #{tpu_custom_call.1} parent=5 // pred_fallthru
        _
      %p163 = scmp.lt.s32.totalorder %s16, 2
      // Predicated region
      $region21: #{tpu_custom_call.1} parent=5 // pred_check
        %p164 = pneg %p163
      $region22: #{tpu_custom_call.1} parent=5 // pred_check_branch
        %166 = sbr.rel (%p164) target = $region24
      $region23: #{tpu_custom_call.1} parent=5 // pred_region
        // Predicated region
        $region25: #{tpu_custom_call.1} parent=23 // pred_check
          %p167 = pneg %p50
        $region26: #{tpu_custom_call.1} parent=23 // pred_check_branch
          %169 = sbr.rel (%p167) target = $region28
        $region27: #{tpu_custom_call.1} parent=23 // pred_region
          %s170 = sand.u32 %s40, 1
          %s171 = scalar_lea.sflag [#allocation3], %s170
          %s172 = sand.u32 %s40, 1
          %s173 = smul.addr %s172, 16
          %s174 = scalar_lea.vmem [#allocation2], %s173
          %s175 = smul.u32 2, %s23
          %s176 = smul.u32 2, %s24
          %s178 = ssub.s32 256, 256
          %179 = vsyncadd %s171, %s178
          %s180 = smul.addr %s175, 2
          %s181 = sadd.s32 %s176, %s180
          %s182 = smul.addr %s181, 64
          %s183 = scalar_lea.hbm %s0, %s182
          %s184 = sshll.u32 %s174, 4
          %s185 = int_to_ptr.vmem [resolvable:$true] %s184
          %190 = dma.hbm_to_vmem [thread:$0]  %s183, 256, %s185, %s171, 128, 128, 8
        $region28: #{tpu_custom_call.1} parent=23 // pred_fallthru
          _
      $region24: #{tpu_custom_call.1} parent=5 // pred_fallthru
        _
      %p191 = scmp.le.s32.totalorder 1, %s16
      %p192 = scmp.lt.s32.totalorder %s16, 3
      %p193 = pnand %p191, %p192
      %p194 = pneg %p193
      // Predicated region
      $region29: #{tpu_custom_call.1} parent=5 // pred_check
        _
      $region30: #{tpu_custom_call.1} parent=5 // pred_check_branch
        %196 = sbr.rel (%p193) target = $region32
      $region31: #{tpu_custom_call.1} parent=5 // pred_region
        %s197 = ssub.s32 %s16, 1
        %s198 = sand.u32 %s43, 1
        %s199 = scalar_lea.sflag [#allocation3], %s198
        %s200 = sand.u32 %s43, 1
        %s201 = smul.addr %s200, 16
        %s202 = scalar_lea.vmem [#allocation2], %s201
        // Predicated region
        $region33: #{tpu_custom_call.1} parent=31 // pred_check
          %p203 = pneg %p56
        $region34: #{tpu_custom_call.1} parent=31 // pred_check_branch
          %205 = sbr.rel (%p203) target = $region36
        $region35: #{tpu_custom_call.1} parent=31 // pred_region
          %206 = dma.done %s199, 256
        $region36: #{tpu_custom_call.1} parent=31 // pred_fallthru
          _
        // Predicated region
        $region37: #{tpu_custom_call.1} parent=31 // pred_check
          %p207 = pneg %p77
        $region38: #{tpu_custom_call.1} parent=31 // pred_check_branch
          %209 = sbr.rel (%p207) target = $region40
        $region39: #{tpu_custom_call.1} parent=31 // pred_region
          %210 = dma.done [#allocation6], 128
        $region40: #{tpu_custom_call.1} parent=31 // pred_fallthru
          _
        // Predicated region
        $region41: #{tpu_custom_call.1} parent=31 // pred_check
          %p211 = pneg %p98
        $region42: #{tpu_custom_call.1} parent=31 // pred_check_branch
          %213 = sbr.rel (%p211) target = $region44
        $region43: #{tpu_custom_call.1} parent=31 // pred_region
          %214 = dma.done [#allocation6], 128
        $region44: #{tpu_custom_call.1} parent=31 // pred_fallthru
          _
        %s215 = sand.u32 %s43, 1
        %s216 = scalar_lea.sflag [#allocation3], %s215
        %s217 = sand.u32 %s43, 1
        %s218 = smul.addr %s217, 16
        %s219 = scalar_lea.vmem [#allocation2], %s218
        %p220 = pneg %p56
        %p221 = pneg %p53
        %p222 = pneg %p77
        %p223 = pneg %p74
        %p224 = pneg %p98
        %p225 = pneg %p95
        %p226 = pneg %p126
        %p227 = pneg %p123
        %s228 = sand.u32 %s113, 1
        %s229 = scalar_lea.sflag [#allocation4], %s228
        %s230 = sand.u32 %s113, 1
        %s231 = smul.addr %s230, 16
        %s232 = scalar_lea.vmem [#allocation8], %s231
        %s233 = smul.u32 2, %s25
        %s234 = smul.u32 2, %s26
        %s235 = smul.u32 2, %s25
        %s236 = smul.u32 2, %s26
        %v237 = vld [vmem:[%s202] sm:$0xff]
        %v238 = vld [vmem:[%s202 + $0x8] sm:$0xff]
        %v241 = vcombine.high %v237, %v237
        %v242 = vcombine.high %v238, %v238
        %vm245 = vcmask 1043456
        %v246 = vsel %vm245, %v237, 0.0
        %v247 = vrot.slane %v246, 4
        %v248 = vadd.f32 %v246, %v247
        %v249 = vrot.slane %v248, 2
        %v250 = vadd.f32 %v248, %v249
        %v251 = vrot.slane %v250, 1
        %v252 = vadd.f32 %v250, %v251
        %v253 = vsel %vm245, %v241, 0.0
        %v254 = vrot.slane %v253, 4
        %v255 = vadd.f32 %v253, %v254
        %v256 = vrot.slane %v255, 2
        %v257 = vadd.f32 %v255, %v256
        %v258 = vrot.slane %v257, 1
        %v259 = vadd.f32 %v257, %v258
        %v260 = vsel %vm245, %v238, 0.0
        %v261 = vrot.slane %v260, 4
        %v262 = vadd.f32 %v260, %v261
        %v263 = vrot.slane %v262, 2
        %v264 = vadd.f32 %v262, %v263
        %v265 = vrot.slane %v264, 1
        %v266 = vadd.f32 %v264, %v265
        %v267 = vsel %vm245, %v242, 0.0
        %v268 = vrot.slane %v267, 4
        %v269 = vadd.f32 %v267, %v268
        %v270 = vrot.slane %v269, 2
        %v271 = vadd.f32 %v269, %v270
        %v272 = vrot.slane %v271, 1
        %v273 = vadd.f32 %v271, %v272
        %v274 = vrcp.pop 4.0
        %v275 = vmul.f32 %v252, %v274
        %v276 = vmul.f32 %v259, %v274
        %v277 = vmul.f32 %v266, %v274
        %v278 = vmul.f32 %v273, %v274
        %v283 = vcombine.low %v275, %v276
        %v284 = vcombine.low %v277, %v278
        %v287 = vsub.f32 %v237, %v283
        %v288 = vsub.f32 %v238, %v284
        %v289 = vmul.f32 %v287, %v287
        %v290 = vmul.f32 %v288, %v288
        %v293 = vcombine.high %v289, %v289
        %v294 = vcombine.high %v290, %v290
        %v297 = vsel %vm245, %v289, 0.0
        %v298 = vrot.slane %v297, 4
        %v299 = vadd.f32 %v297, %v298
        %v300 = vrot.slane %v299, 2
        %v301 = vadd.f32 %v299, %v300
        %v302 = vrot.slane %v301, 1
        %v303 = vadd.f32 %v301, %v302
        %v304 = vsel %vm245, %v293, 0.0
        %v305 = vrot.slane %v304, 4
        %v306 = vadd.f32 %v304, %v305
        %v307 = vrot.slane %v306, 2
        %v308 = vadd.f32 %v306, %v307
        %v309 = vrot.slane %v308, 1
        %v310 = vadd.f32 %v308, %v309
        %v311 = vsel %vm245, %v290, 0.0
        %v312 = vrot.slane %v311, 4
        %v313 = vadd.f32 %v311, %v312
        %v314 = vrot.slane %v313, 2
        %v315 = vadd.f32 %v313, %v314
        %v316 = vrot.slane %v315, 1
        %v317 = vadd.f32 %v315, %v316
        %v318 = vsel %vm245, %v294, 0.0
        %v319 = vrot.slane %v318, 4
        %v320 = vadd.f32 %v318, %v319
        %v321 = vrot.slane %v320, 2
        %v322 = vadd.f32 %v320, %v321
        %v323 = vrot.slane %v322, 1
        %v324 = vadd.f32 %v322, %v323
        %v325 = vmul.f32 %v303, 0.33333334
        %v326 = vmul.f32 %v310, 0.33333334
        %v327 = vmul.f32 %v317, 0.33333334
        %v328 = vmul.f32 %v324, 0.33333334
        %v329 = vrsqrt.pop %v325
        %v330 = vmul.f32 %v325, %v329
        %vm331 = vcmp.eq.f32.partialorder %v325, inf
        %v332 = vsel %vm331, %v325, %v330
        %vm333 = vcmp.eq.f32.partialorder %v325, 0.0
        %v334 = vand.u32 %v325, 2147483648
        %v335 = vsel %vm333, %v334, %v332
        %v336 = vrsqrt.pop %v326
        %v337 = vmul.f32 %v326, %v336
        %vm338 = vcmp.eq.f32.partialorder %v326, inf
        %v339 = vsel %vm338, %v326, %v337
        %vm340 = vcmp.eq.f32.partialorder %v326, 0.0
        %v341 = vand.u32 %v326, 2147483648
        %v342 = vsel %vm340, %v341, %v339
        %v343 = vrsqrt.pop %v327
        %v344 = vmul.f32 %v327, %v343
        %vm345 = vcmp.eq.f32.partialorder %v327, inf
        %v346 = vsel %vm345, %v327, %v344
        %vm347 = vcmp.eq.f32.partialorder %v327, 0.0
        %v348 = vand.u32 %v327, 2147483648
        %v349 = vsel %vm347, %v348, %v346
        %v350 = vrsqrt.pop %v328
        %v351 = vmul.f32 %v328, %v350
        %vm352 = vcmp.eq.f32.partialorder %v328, inf
        %v353 = vsel %vm352, %v328, %v351
        %vm354 = vcmp.eq.f32.partialorder %v328, 0.0
        %v355 = vand.u32 %v328, 2147483648
        %v356 = vsel %vm354, %v355, %v353
        %v357 = vadd.f32 %v335, 1e-05
        %v358 = vadd.f32 %v342, 1e-05
        %v359 = vadd.f32 %v349, 1e-05
        %v360 = vadd.f32 %v356, 1e-05
        %v361 = vrcp.pop %v357
        %v362 = vrcp.pop %v358
        %v363 = vrcp.pop %v359
        %v364 = vrcp.pop %v360
        %v369 = vcombine.low %v361, %v362
        %v370 = vcombine.low %v363, %v364
        %v373 = vmul.f32 %v287, %v369
        %v374 = vmul.f32 %v288, %v370
        %v375 = vld [vmem:[#allocation5] sm:$0xff]
        %v376 = vmul.f32 %v373, %v375
        %v377 = vmul.f32 %v374, %v375
        %v378 = vld [vmem:[#allocation7] sm:$0xff]
        %v379 = vadd.f32 %v376, %v378
        %v380 = vadd.f32 %v377, %v378
        %381 = vst [vmem:[%s232] sm:$0xff] %v379
        %382 = vst [vmem:[%s232 + $0x8] sm:$0xff] %v380
        %s383 = sand.u32 %s113, 1
        %s384 = scalar_lea.sflag [#allocation4], %s383
        %s385 = sand.u32 %s113, 1
        %s386 = smul.addr %s385, 16
        %s387 = scalar_lea.vmem [#allocation8], %s386
        // Predicated region
        $region45: #{tpu_custom_call.1} parent=31 // pred_check
          %p388 = pneg %p123
        $region46: #{tpu_custom_call.1} parent=31 // pred_check_branch
          %390 = sbr.rel (%p388) target = $region48
        $region47: #{tpu_custom_call.1} parent=31 // pred_region
          %s391 = smul.u32 2, %s25
          %s392 = smul.u32 2, %s26
          %s394 = ssub.s32 256, 256
          %395 = vsyncadd %s384, %s394
          %s396 = smul.addr %s391, 2
          %s397 = sadd.s32 %s392, %s396
          %s398 = smul.addr %s397, 64
          %s399 = scalar_lea.hbm %s3, %s398
          %s400 = sshll.u32 %s387, 4
          %s401 = int_to_ptr.vmem [resolvable:$true] %s400
          %406 = dma.vmem_to_hbm [thread:$0]  %s401, 256, %s399, %s384, 128, 128, 8
        $region48: #{tpu_custom_call.1} parent=31 // pred_fallthru
          _
      $region32: #{tpu_custom_call.1} parent=5 // pred_fallthru
        _
      %p407 = scmp.le.s32.totalorder 2, %s16
      // Predicated region
      $region49: #{tpu_custom_call.1} parent=5 // pred_check
        %p408 = pneg %p407
      $region50: #{tpu_custom_call.1} parent=5 // pred_check_branch
        %410 = sbr.rel (%p408) target = $region52
      $region51: #{tpu_custom_call.1} parent=5 // pred_region
        %s411 = ssub.s32 %s16, 2
        // Predicated region
        $region53: #{tpu_custom_call.1} parent=51 // pred_check
          %p412 = pneg %p129
        $region54: #{tpu_custom_call.1} parent=51 // pred_check_branch
          %414 = sbr.rel (%p412) target = $region56
        $region55: #{tpu_custom_call.1} parent=51 // pred_region
          %s415 = sand.u32 %s114, 1
          %s416 = scalar_lea.sflag [#allocation4], %s415
          %s417 = sand.u32 %s114, 1
          %s418 = smul.addr %s417, 16
          %s419 = scalar_lea.vmem [#allocation8], %s418
          %420 = dma.done %s416, 256
        $region56: #{tpu_custom_call.1} parent=51 // pred_fallthru
          _
      $region52: #{tpu_custom_call.1} parent=5 // pred_fallthru
        _
    $region6: #{tpu_custom_call.1} parent=1 // loop_footer
      %s20 = sadd.s32 1, %s16
    $region7: #{tpu_custom_call.1} parent=1 // loop_footer_branch
      %15 = sbr.rel target = $region3
    $region8: #{tpu_custom_call.1} parent=1 // loop_exit
      _
    %421 = vsyncpa [#allocation3], 1
    %s422 = scalar_lea.sflag [#allocation3], 1
    %423 = vsyncpa %s422, 1
    %424 = vsyncpa [#allocation6], 1
    %425 = vsyncpa [#allocation4], 1
    %s426 = scalar_lea.sflag [#allocation4], 1
    %427 = vsyncpa %s426, 1

</llo_original>
